<compile_context>
chip_gen: v7x
topology: tpu7x:2x2x1
jax: 0.10.0
libtpu: 0.0.40
codegen_flags: <defaults>
</compile_context>

<pallas_src>
import functools

import jax
import jax.numpy as jnp
from jax.experimental import pallas as pl
from jax.experimental.pallas import tpu as pltpu

_MIB = 1024 * 1024


def _round_up(x, m):
    return (x + m - 1) // m * m


def _round_down(x, m):
    return (x // m) * m


def _vmem_capacity_bytes():
    """Physical VMEM of the local TPU generation (fallback: 64 MiB == v7x)."""
    try:
        return int(pltpu.get_tpu_info().vmem_capacity_bytes)
    except Exception:
        return 64 * _MIB


def _energy_single_pass_kernel(x_ref, o_ref):
    """Whole class axis resident in the block: one-shot -logsumexp.

    Output is stored lane-dense: each row tile writes a (1, 1, tile_rows)
    block (rows along lanes), so stores are full-width vst's instead of
    single-lane masked stores.
    """
    x = x_ref[...].astype(jnp.float32)                       # (R, C)
    m = jnp.max(x, axis=-1)                                  # (R,) lane-major
    m_safe = jnp.where(jnp.isfinite(m), m, 0.0)              # 0 for all -inf / +inf
    s = jnp.sum(jnp.exp(x - m_safe[:, None]), axis=-1)       # (R,)
    # all -inf row: s == 0 -> logsumexp == -inf -> energy == +inf (no NaN).
    lse = jnp.where(s > 0.0, m_safe + jnp.log(s), -jnp.inf)
    o_ref[0, 0, :] = (-lse).astype(o_ref.dtype)


def _energy_online_kernel(x_ref, o_ref, m_ref, s_ref, *, num_classes, tile_c):
    """Online (flash-style) -logsumexp over a tiled class axis.

    Grid = (row_tiles, class_tiles); class axis is last ("arbitrary").
    m_ref / s_ref hold the running max / running sum(exp) for the row tile.
    Padded-class-tail masking only runs on the last class tile.
    """
    k = pl.program_id(1)
    last = pl.num_programs(1) - 1

    @pl.when(k == 0)
    def _():
        m_ref[...] = jnp.full_like(m_ref, -jnp.inf)
        s_ref[...] = jnp.zeros_like(s_ref)

    def accumulate(x):
        m_prev = m_ref[...]
        m_new = jnp.maximum(m_prev, jnp.max(x, axis=-1, keepdims=True))
        # -inf-safe base: an all -inf prefix must contribute exactly 0.
        m_safe = jnp.where(jnp.isfinite(m_new), m_new, 0.0)
        corr = jnp.exp(m_prev - m_safe)                       # 0 when m_prev == -inf
        s_ref[...] = corr * s_ref[...] + jnp.sum(
            jnp.exp(x - m_safe), axis=-1, keepdims=True)
        m_ref[...] = m_new

    if num_classes % tile_c != 0:
        # Mask only the last class tile; hot tiles stay mask-free (static check,
        # so zero cost when num_classes divides tile_c).
        @pl.when(k != last)
        def _():
            accumulate(x_ref[...].astype(jnp.float32))

        @pl.when(k == last)
        def _():
            x = x_ref[...].astype(jnp.float32)
            col = jax.lax.broadcasted_iota(jnp.int32, x.shape, 1) + k * tile_c
            accumulate(jnp.where(col < num_classes, x, -jnp.inf))
    else:
        accumulate(x_ref[...].astype(jnp.float32))

    @pl.when(k == last)
    def _():
        m = m_ref[...]
        s = s_ref[...]
        lse = jnp.where(
            s > 0.0, jnp.where(jnp.isfinite(m), m, 0.0) + jnp.log(s), -jnp.inf)
        o_ref[...] = (-lse).astype(o_ref.dtype)


def classifier_energy(logits, *, tile_rows=None, tile_c=None):
    """-logsumexp(logits, axis=-1) via a Pallas TPU kernel.

    Accepts any leading batch dims; reduction is over the last axis.
    Output dtype matches the input dtype (like torch).
    """
    orig_shape = logits.shape
    num_classes = int(orig_shape[-1])
    rows = 1
    for d in orig_shape[:-1]:
        rows *= int(d)
    x2d = logits.reshape(rows, num_classes)

    itemsize = jnp.dtype(logits.dtype).itemsize
    sub = 16 if itemsize == 2 else 8            # sublane packing multiple

    # ---- generation-aware budgets: bigger blocks + higher VMEM ceiling on
    # 128 MiB-VMEM parts (v5e/v6e); 64 MiB v7x gets 4 MiB blocks.
    vmem_cap = _vmem_capacity_bytes()
    if vmem_cap >= 128 * _MIB:
        target_bytes = 8 * _MIB                 # per input block (lane-padded VMEM)
        vmem_ceiling = 100 * _MIB
    else:
        target_bytes = 4 * _MIB
        vmem_ceiling = 60 * _MIB

    lane_c_full = _round_up(num_classes, 128)

    # ---- path selection: keep the full class axis in-block whenever even a
    # minimal (sub-row) block fits the byte budget.
    if tile_c is not None:
        single_pass = int(tile_c) >= num_classes
    else:
        single_pass = sub * lane_c_full * itemsize <= target_bytes

    if single_pass:
        tile_c_eff = num_classes
    else:
        tile_c_eff = 2048 if tile_c is None else int(tile_c)
        tile_c_eff = max(128, _round_down(min(tile_c_eff, num_classes), 128))
    lane_c = _round_up(tile_c_eff, 128)

    # ---- row tile: byte-budget driven (no artificial row cap).
    if tile_rows is None:
        tile_rows = max(sub, _round_down(target_bytes // (lane_c * itemsize), sub))
    else:
        tile_rows = max(sub, _round_up(int(tile_rows), sub))
    tile_rows = min(tile_rows, max(sub, _round_up(rows, sub)))

    num_row_tiles = pl.cdiv(rows, tile_rows)

    # ---- explicit scoped-VMEM budget: double-buffered inputs/outputs plus
    # the in-kernel f32 temporaries (x.astype(f32), x - m, exp(...)).
    in_blk = tile_rows * lane_c * itemsize
    blk_f32 = tile_rows * lane_c * 4
    out_blk_single = 8 * _round_up(tile_rows, 128) * itemsize   # (1,1,R) lane-dense
    out_blk_online = tile_rows * 128 * itemsize                 # (R,1) lane-padded
    scratch = 2 * tile_rows * 128 * 4
    vmem_limit = (2 * in_blk + 3 * blk_f32 + scratch
                  + 2 * max(out_blk_single, out_blk_online))
    vmem_limit = int(vmem_limit * 1.25) + 2 * _MIB
    vmem_limit = min(max(vmem_limit, 32 * _MIB), vmem_ceiling)

    cost = pl.CostEstimate(
        flops=3 * rows * num_classes,
        transcendentals=rows * num_classes,
        bytes_accessed=rows * num_classes * itemsize + rows * itemsize,
    )

    if single_pass:
        out3 = pl.pallas_call(
            _energy_single_pass_kernel,
            out_shape=jax.ShapeDtypeStruct(
                (num_row_tiles, 1, tile_rows), logits.dtype),
            grid_spec=pltpu.PrefetchScalarGridSpec(
                num_scalar_prefetch=0,
                grid=(num_row_tiles,),
                in_specs=[
                    pl.BlockSpec((tile_rows, num_classes), lambda i: (i, 0)),
                ],
                out_specs=pl.BlockSpec((1, 1, tile_rows), lambda i: (i, 0, 0)),
            ),
            compiler_params=pltpu.CompilerParams(
                dimension_semantics=("parallel",),
                vmem_limit_bytes=vmem_limit,
            ),
            cost_estimate=cost,
        )(x2d)
        # NOTE: when rows % tile_rows != 0 the padded tail rows compute on
        # unspecified data; rows are independent and those outputs are trimmed
        # below, so this is harmless (do not add cross-row reductions here).
        out_flat = out3.reshape(num_row_tiles * tile_rows)[:rows]
        return out_flat.reshape(orig_shape[:-1])

    # ---- online-LSE path (very large class axes only) ----
    kernel = functools.partial(
        _energy_online_kernel, num_classes=num_classes, tile_c=tile_c_eff)
    grid = (num_row_tiles, pl.cdiv(num_classes, tile_c_eff))
    out2 = pl.pallas_call(
        kernel,
        out_shape=jax.ShapeDtypeStruct((rows, 1), logits.dtype),
        grid_spec=pltpu.PrefetchScalarGridSpec(
            num_scalar_prefetch=0,
            grid=grid,
            in_specs=[
                pl.BlockSpec((tile_rows, tile_c_eff), lambda i, k: (i, k)),
            ],
            out_specs=pl.BlockSpec((tile_rows, 1), lambda i, k: (i, 0)),
            scratch_shapes=[
                pltpu.VMEM((tile_rows, 1), jnp.float32),   # running max
                pltpu.VMEM((tile_rows, 1), jnp.float32),   # running sum
            ],
        ),
        compiler_params=pltpu.CompilerParams(
            dimension_semantics=("parallel", "arbitrary"),
            vmem_limit_bytes=vmem_limit,
        ),
        cost_estimate=cost,
    )(x2d)
    return out2.reshape(orig_shape[:-1])


if __name__ == "__main__":
    key = jax.random.PRNGKey(0)

    # 1) Small classifier head (single-pass path, one row tile).
    logits = jax.random.normal(key, (8, 32), dtype=jnp.float32)
    energy = classifier_energy(logits)
    jax.block_until_ready(energy)
    ref = -jax.scipy.special.logsumexp(logits, axis=-1)
    assert energy.shape == ref.shape
    assert jnp.allclose(energy, ref, atol=1e-5, rtol=1e-5)

    # 2) Multiple row tiles + row-tail trimming through the lane-dense output.
    logits_b = jax.random.normal(jax.random.PRNGKey(2), (50, 16), dtype=jnp.float32)
    energy_b = classifier_energy(logits_b, tile_rows=16)
    jax.block_until_ready(energy_b)
    ref_b = -jax.scipy.special.logsumexp(logits_b, axis=-1)
    assert energy_b.shape == ref_b.shape
    assert jnp.allclose(energy_b, ref_b, atol=1e-5, rtol=1e-5)

    # 3) Online-LSE path with a masked class tail (C=200, tile_c=128).
    logits2 = jax.random.normal(
        jax.random.PRNGKey(1), (2, 3, 200), dtype=jnp.float32)
    energy2 = classifier_energy(logits2, tile_rows=8, tile_c=128)
    jax.block_until_ready(energy2)
    ref2 = -jax.scipy.special.logsumexp(logits2, axis=-1)
    assert energy2.shape == ref2.shape
    assert jnp.allclose(energy2, ref2, atol=1e-5, rtol=1e-5)

    # 4) All -inf row -> logsumexp == -inf -> energy == +inf (matches torch).
    logits3 = logits.at[3].set(-jnp.inf)
    energy3 = classifier_energy(logits3)
    jax.block_until_ready(energy3)
    ref3 = -jax.scipy.special.logsumexp(logits3, axis=-1)
    assert jnp.allclose(energy3, ref3, atol=1e-5, rtol=1e-5)

    # 5) bf16 streamed without wrapper upcast (f32 compute inside the kernel).
    logits4 = jax.random.normal(
        jax.random.PRNGKey(3), (32, 256), dtype=jnp.float32).astype(jnp.bfloat16)
    energy4 = classifier_energy(logits4)
    jax.block_until_ready(energy4)
    ref4 = (-jax.scipy.special.logsumexp(
        logits4.astype(jnp.float32), axis=-1)).astype(jnp.bfloat16)
    assert energy4.shape == ref4.shape
    assert jnp.allclose(energy4.astype(jnp.float32), ref4.astype(jnp.float32),
                        atol=5e-2, rtol=2e-2)

    print("KERNEL_OK")
</pallas_src>

<mosaic_0001>
module attributes {stable_mosaic.version = 11 : i64} {
  func.func @_energy_single_pass_kernel(%arg0: i32, %arg1: memref<8x32xf32, #tpu.memory_space<vmem>>, %arg2: memref<1x1x8xf32, #tpu.memory_space<vmem>>) attributes {dimension_semantics = [#tpu.dimension_semantics<parallel>], iteration_bounds = array<i64: 1>, scalar_prefetch = 0 : i64, scratch_operands = 0 : i64, tpu.core_type = #tpu.core_type<tc>, window_params = [{transform_indices = @transform_0, window_bounds = array<i64: 8, 32>}, {transform_indices = @transform_1, window_bounds = array<i64: 1, 1, 8>}]} {
    %c0 = arith.constant 0 : index
    %c0_0 = arith.constant 0 : index
    %0 = vector.load %arg1[%c0, %c0_0] : memref<8x32xf32, #tpu.memory_space<vmem>>, vector<8x32xf32>
    %cst = arith.constant dense<0xFF800000> : vector<8xf32>
    %1 = vector.multi_reduction <maximumf>, %0, %cst [1] : vector<8x32xf32> to vector<8xf32>
    %2 = tpu.weird %1 : vector<8xf32> -> vector<8xi1>
    %cst_1 = arith.constant dense<true> : vector<8xi1>
    %3 = arith.xori %2, %cst_1 : vector<8xi1>
    %cst_2 = arith.constant 0.000000e+00 : f32
    %4 = vector.broadcast %cst_2 : f32 to vector<8xf32>
    %5 = arith.select %3, %1, %4 : vector<8xi1>, vector<8xf32>
    %6 = vector.shape_cast %5 : vector<8xf32> to vector<8x1xf32>
    %7 = vector.broadcast %6 : vector<8x1xf32> to vector<8x32xf32>
    %8 = arith.subf %0, %7 : vector<8x32xf32>
    %9 = math.exp %8 : vector<8x32xf32>
    %cst_3 = arith.constant dense<0.000000e+00> : vector<8xf32>
    %10 = vector.multi_reduction <add>, %9, %cst_3 [1] : vector<8x32xf32> to vector<8xf32>
    %cst_4 = arith.constant 0.000000e+00 : f32
    %11 = vector.broadcast %cst_4 : f32 to vector<8xf32>
    %12 = arith.cmpf ogt, %10, %11 : vector<8xf32>
    %13 = math.log %10 : vector<8xf32>
    %14 = arith.addf %5, %13 : vector<8xf32>
    %cst_5 = arith.constant 0xFF800000 : f32
    %15 = vector.broadcast %cst_5 : f32 to vector<8xf32>
    %16 = arith.select %12, %14, %15 : vector<8xi1>, vector<8xf32>
    %cst_6 = arith.constant 0.000000e+00 : f32
    %17 = vector.broadcast %cst_6 : f32 to vector<8xf32>
    %18 = arith.subf %17, %16 : vector<8xf32>
    %c0_7 = arith.constant 0 : index
    %c0_8 = arith.constant 0 : index
    %c0_9 = arith.constant 0 : index
    %19 = vector.load %arg2[%c0_7, %c0_8, %c0_9] : memref<1x1x8xf32, #tpu.memory_space<vmem>>, vector<1x1x8xf32>
    %20 = vector.shape_cast %19 : vector<1x1x8xf32> to vector<8xf32>
    %21 = vector.shape_cast %18 : vector<8xf32> to vector<1x1x8xf32>
    tpu.vector_store %arg2[%c0_7, %c0_8, %c0_9], %21 {strides = array<i32>} : memref<1x1x8xf32, #tpu.memory_space<vmem>>, vector<1x1x8xf32>,
    return
  }
  func.func @transform_0(%arg0: i32) -> (i32, i32) {
    %c0_i32 = arith.constant 0 : i32
    %c0_i32_0 = arith.constant 0 : i32
    return %arg0, %c0_i32 : i32, i32
  }
  func.func @transform_1(%arg0: i32) -> (i32, i32, i32) {
    %c0_i32 = arith.constant 0 : i32
    %c0_i32_0 = arith.constant 0 : i32
    %c0_i32_1 = arith.constant 0 : i32
    return %arg0, %c0_i32, %c0_i32_0 : i32, i32, i32
  }
}

</mosaic_0001>

<llo_original>
// kernel: tpu_custom_call.1
$region0: #{tpu_custom_call.1}
  #allocation0 [shape = 'u32[]', space=smem, size = 0x4, offset = 0x4, fixed_abs, tag = 'smem constant byte address 0x4 - core index']
  #allocation1 [shape = 'u32[144,128]{1,0:T(1,128)}', space=vmem, size = 0x12000, scoped, tag = 'internal scratch']
  %s0 = inlined_call_operand.hbm [shape: f32[8,32], index: 0, kind: input, shape index: {}]
  %s1 = inlined_call_operand.hbm [shape: f32[1,1,8], index: 1, kind: output, shape index: {}]
  %s2 = sld [smem:[#allocation0]]
  $region18: #{tpu_custom_call.1} parent=0
    _
  %s4 = ssub.s32 1, %s2
  %s5 = scalar_select 0, %s4, %s2
  $region1: #{tpu_custom_call.1} parent=0
    #allocation2 [shape = 'u8[4096]{0}', space=vmem, size = 0x1000, scoped, tag = 'input window, operand 0, single buffered']
    #allocation3 [shape = 's32[1]{0}', space=sflag, size = 0x4, scoped, tag = 'scoped memory for tpu_custom_call.1']
    #allocation4 [shape = 's32[1]{0}', space=sflag, size = 0x4, scoped, tag = 'scoped memory for tpu_custom_call.1']
    #allocation5 [shape = 'u8[512]{0}', space=vmem, size = 0x400, scoped, tag = 'output window, operand 0, single buffered']
    %6 = vsyncpa [#allocation3], 0
    %7 = vsyncpa [#allocation4], 0
    // Predicated region
    $region2: #{tpu_custom_call.1} parent=1 // pred_check
      _
    $region3: #{tpu_custom_call.1} parent=1 // pred_check_branch
      %9 = sbr.rel (0) target = $region5
    $region4: #{tpu_custom_call.1} parent=1 // pred_region
      %s11 = ssub.s32 128, 128
      %12 = vsyncadd [#allocation3], %s11
      %s14 = sshll.u32 [#allocation2], 4
      %s15 = int_to_ptr.vmem [resolvable:$true] %s14
      %17 = dma.hbm_to_vmem [thread:$0]  %s0, 128, %s15, [#allocation3]
    $region5: #{tpu_custom_call.1} parent=1 // pred_fallthru
      _
    // Predicated region
    $region6: #{tpu_custom_call.1} parent=1 // pred_check
      _
    $region7: #{tpu_custom_call.1} parent=1 // pred_check_branch
      %19 = sbr.rel (0) target = $region9
    $region8: #{tpu_custom_call.1} parent=1 // pred_region
      %20 = dma.done [#allocation3], 128
    $region9: #{tpu_custom_call.1} parent=1 // pred_fallthru
      _
    %v21 = vld [vmem:[#allocation2] sm:$0xff]
    %vm22 = vcmask 261120
    %v23 = vsel %vm22, %v21, -inf
    %24 = vmax.xlane.f32.xlu0 %v23
    %v25 = vpop.xlane.xlu0 %24
    %vm26 = vweird.f32 %v25
    %vm27 = vmxor %vm26, 1
    %v28 = vsel %vm27, %v25, 0.0
    %v29 = vsub.f32 %v21, %v28
    %v30 = vmul.f32 %v29, 1.442695
    %v31 = vpow.pop %v30
    %v32 = vsel %vm22, %v31, 0.0
    %33 = vadd.xlane.f32.xlu0 %v32
    %v34 = vpop.xlane.xlu0 %33
    %vm35 = vcmp.gt.f32.partialorder %v34, 0.0
    %v36 = vlog2.pop %v34
    %v37 = vmul.f32 %v36, 0.6931472
    %v38 = vadd.f32 %v28, %v37
    %v39 = vsel %vm35, %v38, -inf
    %v40 = vsub.f32 0.0, %v39
    %v42 = vlaneseq
    %v43 = vand.u32 %v42, 127
    %v44 = vlaneseq
    %v45 = vshrl.u32 %v44, 7
    %v46 = vsub.s32 %v43, %v45
    %v47 = vrot.slane %v40, %v46
    %vm49 = vcmask 57344
    %50 = vst.msk [vmem:[#allocation5] sm:$0x1] %vm49, %v47
    // Predicated region
    $region10: #{tpu_custom_call.1} parent=1 // pred_check
      _
    $region11: #{tpu_custom_call.1} parent=1 // pred_check_branch
      %52 = sbr.rel (0) target = $region13
    $region12: #{tpu_custom_call.1} parent=1 // pred_region
      %s54 = ssub.s32 16, 16
      %55 = vsyncadd [#allocation4], %s54
      %s57 = sshll.u32 [#allocation5], 4
      %s58 = int_to_ptr.vmem [resolvable:$true] %s57
      %60 = dma.vmem_to_hbm [thread:$0]  %s58, 16, %s1, [#allocation4]
    $region13: #{tpu_custom_call.1} parent=1 // pred_fallthru
      _
    // Predicated region
    $region14: #{tpu_custom_call.1} parent=1 // pred_check
      _
    $region15: #{tpu_custom_call.1} parent=1 // pred_check_branch
      %62 = sbr.rel (0) target = $region17
    $region16: #{tpu_custom_call.1} parent=1 // pred_region
      %63 = dma.done [#allocation4], 16
    $region17: #{tpu_custom_call.1} parent=1 // pred_fallthru
      _
    %64 = vsyncpa [#allocation3], 1
    %65 = vsyncpa [#allocation4], 1

</llo_original>
